<compile_context>
chip_gen: v5e
topology: v5e:2x2
jax: 0.10.0
libtpu: 0.0.40
codegen_flags: <defaults>
</compile_context>

<pallas_src>
import jax
import jax.numpy as jnp
from jax.experimental import pallas as pl
from jax.experimental.pallas import tpu as pltpu

FEAT = 128                       # encoder/decoder width (fixed by Conv2d(128, 1, ...))
MAX_TILE = 4096                  # lane-tile cap: ~8 MB live VMEM, safe on v5e/v6e/v7x
VMEM_LIMIT = 48 * 1024 * 1024    # explicit scoped-VMEM budget (< v7x 64 MiB physical)


def _round_up(x, m):
    return (x + m - 1) // m * m


def _choose_tiling(hw, max_tile=MAX_TILE):
    """Return (tile, padded_hw): tile is a multiple of 128 that divides padded_hw."""
    hw128 = _round_up(hw, 128)
    if hw128 <= max_tile:
        return hw128, hw128
    best = 128
    for t in range(128, max_tile + 1, 128):   # all multiples of 128, not just powers of 2
        if hw128 % t == 0:
            best = t
    if best >= 1024:
        return best, hw128
    # Only tiny tiles divide the 128-aligned size: pad a little more instead.
    return max_tile, _round_up(hw, max_tile)


# ----------------------------------------------------------------------------
# Kernels
# ----------------------------------------------------------------------------
def _fused_simple_kernel(x_ref, enc_w_ref, enc_b_ref, dec_w_ref, dec_b_ref,
                         out_w_ref, out_b_ref, o_ref):
    # x_ref: (1, Cin, T) bf16.  Weights stored transposed (Cout, Cin).
    x = x_ref[0]
    feat = jnp.dot(enc_w_ref[...], x, preferred_element_type=jnp.float32)
    feat = jnp.maximum(feat + enc_b_ref[...], 0.0).astype(jnp.bfloat16)   # (128, T)
    dec = jnp.dot(dec_w_ref[...], feat, preferred_element_type=jnp.float32)
    dec = jnp.maximum(dec + dec_b_ref[...], 0.0)                          # (128, T) f32
    # 1-row conv_out head on VPU/XLU (broadcast-mul + sublane reduce), not the MXU.
    out = jnp.sum(out_w_ref[...] * dec, axis=0, keepdims=True) + out_b_ref[...]
    o_ref[0] = jnp.maximum(out, 0.0).astype(o_ref.dtype)                  # (1, T) lane-dense


def _fused_hist_kernel(x_ref, enc_w_ref, enc_b_ref, dec_w_ref, dec_b_ref,
                       hist_w_ref, hist_b_ref, hist_ref, pooled_ref):
    x = x_ref[0]                                                          # (Cin, T) bf16
    feat = jnp.dot(enc_w_ref[...], x, preferred_element_type=jnp.float32)
    feat = jnp.maximum(feat + enc_b_ref[...], 0.0)                        # (128, T) f32
    # Per-tile partial pooled-encoder sum; per-image reduction finished in glue.
    pooled_ref[0, 0] = jnp.sum(feat, axis=-1, keepdims=True)              # (128, 1)
    feat = feat.astype(jnp.bfloat16)               # single live bf16 copy feeds next dot
    dec = jnp.dot(dec_w_ref[...], feat, preferred_element_type=jnp.float32)
    dec = jnp.maximum(dec + dec_b_ref[...], 0.0).astype(jnp.bfloat16)     # (128, T)
    logits = jnp.dot(hist_w_ref[...], dec, preferred_element_type=jnp.float32)
    logits = logits + hist_b_ref[...]                                     # (bins, T)
    # Per-pixel softmax over bins (sublane axis), f32 math, exact reciprocal on (1, T).
    m = jnp.max(logits, axis=0, keepdims=True)
    e = jnp.exp(logits - m)
    inv = 1.0 / jnp.sum(e, axis=0, keepdims=True)
    hist_ref[0] = (e * inv).astype(hist_ref.dtype)                        # bf16 writeback


# ----------------------------------------------------------------------------
# DepthHist forward
# ----------------------------------------------------------------------------
class Args:
    def __init__(self, simple):
        self.simple = simple
        self.bins = 16
        self.min_depth = 1e-3
        self.max_depth = 10.0
        self.backbone = "synthetic"
        self.path_pth_model = None


def init_params(key, bins, cin=3):
    ks = jax.random.split(key, 10)
    s = 0.05
    return {
        # weights stored transposed (Cout, Cin) so the kernels compute W^T @ X
        "enc_wT": s * jax.random.normal(ks[0], (FEAT, cin), jnp.float32),
        "enc_b": s * jax.random.normal(ks[1], (FEAT,), jnp.float32),
        "dec_wT": s * jax.random.normal(ks[2], (FEAT, FEAT), jnp.float32),
        "dec_b": s * jax.random.normal(ks[3], (FEAT,), jnp.float32),
        "out_wT": s * jax.random.normal(ks[4], (1, FEAT), jnp.float32),
        "out_b": s * jax.random.normal(ks[5], (1,), jnp.float32),
        "hist_wT": s * jax.random.normal(ks[6], (bins, FEAT), jnp.float32),
        "hist_b": s * jax.random.normal(ks[7], (bins,), jnp.float32),
        "ctr_w": s * jax.random.normal(ks[8], (FEAT, bins), jnp.float32),
        "ctr_b": s * jax.random.normal(ks[9], (bins,), jnp.float32),
    }


def depth_hist_forward(params, x, args):
    # TODO(synk): DepthHist_encoder / DepthHist_decoder / HistLayer internals are
    # not defined in the provided snippet; stand-ins are 1x1-conv feature
    # extractors (3->128, 128->128), a per-pixel softmax histogram over `bins`,
    # and per-image softmax bin centers from the global-pooled encoder feature.
    N, cin, H, W = x.shape
    HW = H * W
    T, HW_pad = _choose_tiling(HW)
    pad = HW_pad - HW
    grid = (N, HW_pad // T)

    # bf16 input halves the HBM read of x; MXU accumulation stays f32.
    x3 = x.reshape(N, cin, HW).astype(jnp.bfloat16)     # pure reshape, no transpose
    if pad:
        x3 = jnp.pad(x3, ((0, 0), (0, 0), (0, pad)))

    enc_w = params["enc_wT"].astype(jnp.bfloat16)       # (128, cin)
    enc_b = params["enc_b"].reshape(FEAT, 1)            # f32
    dec_w = params["dec_wT"].astype(jnp.bfloat16)       # (128, 128)
    dec_b = params["dec_b"].reshape(FEAT, 1)            # f32

    x_spec = pl.BlockSpec((1, cin, T), lambda n, t: (n, 0, t))
    enc_w_spec = pl.BlockSpec((FEAT, cin), lambda n, t: (0, 0))
    enc_b_spec = pl.BlockSpec((FEAT, 1), lambda n, t: (0, 0))
    dec_w_spec = pl.BlockSpec((FEAT, FEAT), lambda n, t: (0, 0))
    dec_b_spec = pl.BlockSpec((FEAT, 1), lambda n, t: (0, 0))

    cparams = pltpu.CompilerParams(
        dimension_semantics=("parallel", "parallel"),
        vmem_limit_bytes=VMEM_LIMIT)

    if args.simple:
        out_w = params["out_wT"].reshape(FEAT, 1)        # f32 column for the VPU head
        out_b = params["out_b"].reshape(1, 1)
        interior = pl.pallas_call(
            _fused_simple_kernel,
            out_shape=jax.ShapeDtypeStruct((N, 1, HW_pad), jnp.float32),
            grid_spec=pltpu.PrefetchScalarGridSpec(
                num_scalar_prefetch=0,
                grid=grid,
                in_specs=[
                    x_spec, enc_w_spec, enc_b_spec, dec_w_spec, dec_b_spec,
                    pl.BlockSpec((FEAT, 1), lambda n, t: (0, 0)),
                    pl.BlockSpec((1, 1), lambda n, t: (0, 0)),
                ],
                out_specs=pl.BlockSpec((1, 1, T), lambda n, t: (n, 0, t)),
            ),
            compiler_params=cparams,
        )(x3, enc_w, enc_b, dec_w, dec_b, out_w, out_b)
        interior = interior[:, :, :HW].reshape(N, 1, H, W)
        # Conv2d(128, 1, k=1, stride=1, padding=1) + ReLU: the 1-pixel border sees
        # only zero-padded input, so it equals relu(bias).
        # TODO(synk): border trick is specific to the 1x1 / padding=1 head.
        pad_val = jnp.maximum(params["out_b"][0], 0.0).astype(interior.dtype)
        return jax.lax.pad(interior, pad_val,
                           ((0, 0, 0), (0, 0, 0), (1, 1, 0), (1, 1, 0)))

    bins = args.bins
    n_t = HW_pad // T
    hist_w = params["hist_wT"].astype(jnp.bfloat16)      # (bins, 128)
    hist_b = params["hist_b"].reshape(bins, 1)

    # ---- single fused pass: encoder -> decoder -> histogram softmax + pooled sums ----
    hist_flat, pooled_parts = pl.pallas_call(
        _fused_hist_kernel,
        out_shape=(jax.ShapeDtypeStruct((N, bins, HW_pad), jnp.bfloat16),
                   jax.ShapeDtypeStruct((N, n_t, FEAT, 1), jnp.float32)),
        grid_spec=pltpu.PrefetchScalarGridSpec(
            num_scalar_prefetch=0,
            grid=grid,
            in_specs=[
                x_spec, enc_w_spec, enc_b_spec, dec_w_spec, dec_b_spec,
                pl.BlockSpec((bins, FEAT), lambda n, t: (0, 0)),
                pl.BlockSpec((bins, 1), lambda n, t: (0, 0)),
            ],
            out_specs=[
                pl.BlockSpec((1, bins, T), lambda n, t: (n, 0, t)),
                pl.BlockSpec((1, 1, FEAT, 1), lambda n, t: (n, t, 0, 0)),
            ],
        ),
        compiler_params=cparams,
    )(x3, enc_w, enc_b, dec_w, dec_b, hist_w, hist_b)

    # ---- bin centers from the pooled encoder feature (tiny glue, overlappable) ----
    pooled_sum = jnp.sum(pooled_parts[:, :, :, 0], axis=1)               # (N, 128)
    if pad:
        # Padded (zero) pixels contribute exactly relu(enc_b) each; subtract them.
        pooled_sum = pooled_sum - pad * jnp.maximum(params["enc_b"], 0.0)[None, :]
    pooled = pooled_sum / HW
    centers = jax.nn.softmax(pooled @ params["ctr_w"] + params["ctr_b"], axis=-1)
    centers = centers * (args.max_depth - args.min_depth)                # (N, bins)

    # ---- depth = cumsum(centers * hist)[:, -1] == sum_b centers[b] * hist[b, :] ----
    if pad:
        hist_flat = hist_flat[:, :, :HW]
    depth = jnp.einsum("nbp,nb->np", hist_flat, centers,
                       preferred_element_type=jnp.float32)
    depth = depth.reshape(N, 1, H, W)
    histogram = hist_flat.reshape(N, bins, H, W)         # bf16, NCHW channel order kept
    return depth, histogram, centers.reshape(N, bins, 1, 1)


if __name__ == "__main__":
    key = jax.random.PRNGKey(0)
    k_x, k_p = jax.random.split(key)
    x = jax.random.normal(k_x, (2, 3, 16, 16), jnp.float32)  # NCHW RGB input

    args_simple = Args(simple=True)
    args_hist = Args(simple=False)
    params = init_params(k_p, args_hist.bins)

    # simple mode: encoder-decoder + Conv2d(128,1,k=1,p=1) + ReLU
    unet_out = depth_hist_forward(params, x, args_simple)
    jax.block_until_ready(unet_out)
    assert unet_out.shape == (2, 1, 18, 18), unet_out.shape  # k=1, padding=1 -> H+2, W+2

    # non-simple (histogram) mode
    depth, histogram, centers = depth_hist_forward(params, x, args_hist)
    jax.block_until_ready((depth, histogram, centers))
    assert depth.shape == (2, 1, 16, 16), depth.shape
    assert histogram.shape == (2, 16, 16, 16), histogram.shape
    assert centers.shape == (2, 16, 1, 1), centers.shape

    # histogram should sum to ~1 per pixel (exact-reciprocal softmax, bf16 storage)
    s = jnp.sum(histogram.astype(jnp.float32), axis=1)
    assert bool(jnp.all(jnp.abs(s - 1.0) < 2e-2)), float(jnp.max(jnp.abs(s - 1.0)))

    print("KERNEL_OK")
</pallas_src>

<mosaic_0001>
module attributes {stable_mosaic.version = 11 : i64} {
  func.func @_fused_simple_kernel(%arg0: i32, %arg1: i32, %arg2: memref<1x3x256xbf16, #tpu.memory_space<vmem>>, %arg3: memref<128x3xbf16, #tpu.memory_space<vmem>>, %arg4: memref<128x1xf32, #tpu.memory_space<vmem>>, %arg5: memref<128x128xbf16, #tpu.memory_space<vmem>>, %arg6: memref<128x1xf32, #tpu.memory_space<vmem>>, %arg7: memref<128x1xf32, #tpu.memory_space<vmem>>, %arg8: memref<1x1xf32, #tpu.memory_space<vmem>>, %arg9: memref<1x1x256xf32, #tpu.memory_space<vmem>>) attributes {dimension_semantics = [#tpu.dimension_semantics<parallel>, #tpu.dimension_semantics<parallel>], iteration_bounds = array<i64: 2, 1>, scalar_prefetch = 0 : i64, scratch_operands = 0 : i64, tpu.core_type = #tpu.core_type<tc>, window_params = [{transform_indices = @transform_0, window_bounds = array<i64: 1, 3, 256>}, {pipeline_mode = #tpu.pipeline_mode<synchronous>, transform_indices = @transform_1, window_bounds = array<i64: 128, 3>}, {pipeline_mode = #tpu.pipeline_mode<synchronous>, transform_indices = @transform_2, window_bounds = array<i64: 128, 1>}, {pipeline_mode = #tpu.pipeline_mode<synchronous>, transform_indices = @transform_3, window_bounds = array<i64: 128, 128>}, {pipeline_mode = #tpu.pipeline_mode<synchronous>, transform_indices = @transform_4, window_bounds = array<i64: 128, 1>}, {pipeline_mode = #tpu.pipeline_mode<synchronous>, transform_indices = @transform_5, window_bounds = array<i64: 128, 1>}, {pipeline_mode = #tpu.pipeline_mode<synchronous>, transform_indices = @transform_6, window_bounds = array<i64: 1, 1>}, {transform_indices = @transform_7, window_bounds = array<i64: 1, 1, 256>}]} {
    %c0 = arith.constant 0 : index
    %c0_0 = arith.constant 0 : index
    %c0_1 = arith.constant 0 : index
    %0 = vector.load %arg2[%c0, %c0_0, %c0_1] : memref<1x3x256xbf16, #tpu.memory_space<vmem>>, vector<1x3x256xbf16>
    %1 = vector.shape_cast %0 : vector<1x3x256xbf16> to vector<3x256xbf16>
    %c0_2 = arith.constant 0 : index
    %c0_3 = arith.constant 0 : index
    %2 = vector.load %arg3[%c0_2, %c0_3] : memref<128x3xbf16, #tpu.memory_space<vmem>>, vector<128x3xbf16>
    %cst = arith.constant dense<0.000000e+00> : vector<128x256xf32>
    %3 = tpu.matmul %2, %1, %cst {dimension_numbers = #tpu.dot_dimension_numbers<[1], [0], [0], [1], [0, 0, 1, 1], [], []>} : vector<128x3xbf16>, vector<3x256xbf16>, vector<128x256xf32> -> vector<128x256xf32>
    %c0_4 = arith.constant 0 : index
    %c0_5 = arith.constant 0 : index
    %4 = vector.load %arg4[%c0_4, %c0_5] : memref<128x1xf32, #tpu.memory_space<vmem>>, vector<128x1xf32>
    %5 = vector.broadcast %4 : vector<128x1xf32> to vector<128x256xf32>
    %6 = arith.addf %3, %5 : vector<128x256xf32>
    %cst_6 = arith.constant 0.000000e+00 : f32
    %7 = vector.broadcast %cst_6 : f32 to vector<128x256xf32>
    %8 = arith.maximumf %6, %7 : vector<128x256xf32>
    %9 = arith.truncf %8 : vector<128x256xf32> to vector<128x256xbf16>
    %c0_7 = arith.constant 0 : index
    %c0_8 = arith.constant 0 : index
    %10 = vector.load %arg5[%c0_7, %c0_8] : memref<128x128xbf16, #tpu.memory_space<vmem>>, vector<128x128xbf16>
    %cst_9 = arith.constant dense<0.000000e+00> : vector<128x256xf32>
    %11 = tpu.matmul %10, %9, %cst_9 {dimension_numbers = #tpu.dot_dimension_numbers<[1], [0], [0], [1], [0, 0, 1, 1], [], []>} : vector<128x128xbf16>, vector<128x256xbf16>, vector<128x256xf32> -> vector<128x256xf32>
    %c0_10 = arith.constant 0 : index
    %c0_11 = arith.constant 0 : index
    %12 = vector.load %arg6[%c0_10, %c0_11] : memref<128x1xf32, #tpu.memory_space<vmem>>, vector<128x1xf32>
    %13 = vector.broadcast %12 : vector<128x1xf32> to vector<128x256xf32>
    %14 = arith.addf %11, %13 : vector<128x256xf32>
    %cst_12 = arith.constant 0.000000e+00 : f32
    %15 = vector.broadcast %cst_12 : f32 to vector<128x256xf32>
    %16 = arith.maximumf %14, %15 : vector<128x256xf32>
    %c0_13 = arith.constant 0 : index
    %c0_14 = arith.constant 0 : index
    %17 = vector.load %arg7[%c0_13, %c0_14] : memref<128x1xf32, #tpu.memory_space<vmem>>, vector<128x1xf32>
    %18 = vector.broadcast %17 : vector<128x1xf32> to vector<128x256xf32>
    %19 = arith.mulf %18, %16 : vector<128x256xf32>
    %cst_15 = arith.constant dense<0.000000e+00> : vector<256xf32>
    %20 = vector.multi_reduction <add>, %19, %cst_15 [0] : vector<128x256xf32> to vector<256xf32>
    %21 = vector.shape_cast %20 : vector<256xf32> to vector<1x256xf32>
    %c0_16 = arith.constant 0 : index
    %c0_17 = arith.constant 0 : index
    %22 = vector.load %arg8[%c0_16, %c0_17] : memref<1x1xf32, #tpu.memory_space<vmem>>, vector<1x1xf32>
    %23 = vector.broadcast %22 : vector<1x1xf32> to vector<1x256xf32>
    %24 = arith.addf %21, %23 : vector<1x256xf32>
    %cst_18 = arith.constant 0.000000e+00 : f32
    %25 = vector.broadcast %cst_18 : f32 to vector<1x256xf32>
    %26 = arith.maximumf %24, %25 : vector<1x256xf32>
    %c0_19 = arith.constant 0 : index
    %c0_20 = arith.constant 0 : index
    %c0_21 = arith.constant 0 : index
    %27 = vector.load %arg9[%c0_19, %c0_20, %c0_21] : memref<1x1x256xf32, #tpu.memory_space<vmem>>, vector<1x1x256xf32>
    %28 = vector.shape_cast %27 : vector<1x1x256xf32> to vector<1x256xf32>
    %29 = vector.shape_cast %26 : vector<1x256xf32> to vector<1x1x256xf32>
    tpu.vector_store %arg9[%c0_19, %c0_20, %c0_21], %29 {strides = array<i32>} : memref<1x1x256xf32, #tpu.memory_space<vmem>>, vector<1x1x256xf32>,
    return
  }
  func.func @transform_0(%arg0: i32, %arg1: i32) -> (i32, i32, i32) {
    %c0_i32 = arith.constant 0 : i32
    %c0_i32_0 = arith.constant 0 : i32
    return %arg0, %c0_i32, %arg1 : i32, i32, i32
  }
  func.func @transform_1(%arg0: i32, %arg1: i32) -> (i32, i32) {
    %c0_i32 = arith.constant 0 : i32
    %c0_i32_0 = arith.constant 0 : i32
    %c0_i32_1 = arith.constant 0 : i32
    return %c0_i32, %c0_i32_0 : i32, i32
  }
  func.func @transform_2(%arg0: i32, %arg1: i32) -> (i32, i32) {
    %c0_i32 = arith.constant 0 : i32
    %c0_i32_0 = arith.constant 0 : i32
    %c0_i32_1 = arith.constant 0 : i32
    return %c0_i32, %c0_i32_0 : i32, i32
  }
  func.func @transform_3(%arg0: i32, %arg1: i32) -> (i32, i32) {
    %c0_i32 = arith.constant 0 : i32
    %c0_i32_0 = arith.constant 0 : i32
    %c0_i32_1 = arith.constant 0 : i32
    return %c0_i32, %c0_i32_0 : i32, i32
  }
  func.func @transform_4(%arg0: i32, %arg1: i32) -> (i32, i32) {
    %c0_i32 = arith.constant 0 : i32
    %c0_i32_0 = arith.constant 0 : i32
    %c0_i32_1 = arith.constant 0 : i32
    return %c0_i32, %c0_i32_0 : i32, i32
  }
  func.func @transform_5(%arg0: i32, %arg1: i32) -> (i32, i32) {
    %c0_i32 = arith.constant 0 : i32
    %c0_i32_0 = arith.constant 0 : i32
    %c0_i32_1 = arith.constant 0 : i32
    return %c0_i32, %c0_i32_0 : i32, i32
  }
  func.func @transform_6(%arg0: i32, %arg1: i32) -> (i32, i32) {
    %c0_i32 = arith.constant 0 : i32
    %c0_i32_0 = arith.constant 0 : i32
    %c0_i32_1 = arith.constant 0 : i32
    return %c0_i32, %c0_i32_0 : i32, i32
  }
  func.func @transform_7(%arg0: i32, %arg1: i32) -> (i32, i32, i32) {
    %c0_i32 = arith.constant 0 : i32
    %c0_i32_0 = arith.constant 0 : i32
    return %arg0, %c0_i32, %arg1 : i32, i32, i32
  }
}

</mosaic_0001>

<llo_original>
// kernel: tpu_custom_call.1
$region0: #{tpu_custom_call.1}
  #allocation0 [shape = 'u32[]', space=smem, size = 0x4, offset = 0x4, fixed_abs, tag = 'smem constant byte address 0x4 - core index']
  #allocation1 [shape = 'u32[72,128]{1,0:T(1,128)}', space=vmem, size = 0x9000, scoped, tag = 'internal scratch']
  #allocation2 [shape = 'f32[1,1]{1,0:T(1,128)S(1)}', space=vmem, size = 0x200, scoped, tag = 'scoped memory for tpu_custom_call.1']
  %s0 = inlined_call_operand.vmem [shape: bf16[2,3,256], index: 0, kind: input, shape index: {}]
  %s1 = inlined_call_operand.vmem [shape: bf16[128,3], index: 1, kind: input, shape index: {}]
  %s2 = inlined_call_operand.vmem [shape: f32[128,1], index: 2, kind: input, shape index: {}]
  %s3 = inlined_call_operand.vmem [shape: bf16[128,128], index: 3, kind: input, shape index: {}]
  %s4 = inlined_call_operand.vmem [shape: f32[128,1], index: 4, kind: input, shape index: {}]
  %s5 = inlined_call_operand.vmem [shape: f32[128,1], index: 5, kind: input, shape index: {}]
  %s6 = inlined_call_operand.<no memory space> [shape: f32[1,1], index: 6, kind: input, shape index: {}]
  %s7 = inlined_call_operand.hbm [shape: f32[2,1,256], index: 7, kind: output, shape index: {}]
  %s8 = sld [smem:[#allocation0]]
  $region61: #{tpu_custom_call.1} parent=0
    _
  %s10 = ssub.s32 1, %s8
  %s11 = scalar_select 0, %s10, %s8
  %v12 = vstv %s6
  %13 = vst [vmem:[#allocation2] sm:$0x1] %v12
  $region1: #{tpu_custom_call.1} parent=0
    #allocation3 [shape = 'u8[2048]{0}', space=vmem, size = 0x800, scoped, tag = 'output window, operand 0']
    #allocation4 [shape = 's32[2]{0}', space=sflag, size = 0x8, scoped, tag = 'scoped memory for tpu_custom_call.1']
    %14 = vsyncpa [#allocation4], 0
    %s15 = scalar_lea.sflag [#allocation4], 1
    %16 = vsyncpa %s15, 0
    loop: start=0, step=1, limit=4
    $region2: #{tpu_custom_call.1} parent=1 // loop_pre_header
      _
    $region3: #{tpu_custom_call.1} parent=1 // loop_header
      %s18 = sphi 0, %s22
      %p19 = scmp.ge.s32.totalorder %s18, 4
      %s25 = sphi 0, %s37
      %s26 = sphi 0, %s33
      %s27 = sphi 0, %s25
      %s28 = sphi 0, %s26
      %s29 = sphi 0, %s27
      %s30 = sphi 0, %s28
      %s42 = sphi 0, %s44
      %s45 = sphi 0, %s42
      %s46 = sphi 0, %s45
      %s62 = sphi 0, %s46
      %s66 = sphi 0, %s66
      %s68 = sphi 0, %s66
      %s69 = sphi 0, %s68
      %s83 = sphi 0, %s69
      %s87 = sphi 0, %s87
      %s89 = sphi 0, %s87
      %s90 = sphi 0, %s89
      %s104 = sphi 0, %s90
      %s108 = sphi 0, %s108
      %s110 = sphi 0, %s108
      %s111 = sphi 0, %s110
      %s125 = sphi 0, %s111
      %s129 = sphi 0, %s129
      %s131 = sphi 0, %s129
      %s132 = sphi 0, %s131
      %s146 = sphi 0, %s132
      %s150 = sphi 0, %s150
      %s152 = sphi 0, %s150
      %s153 = sphi 0, %s152
      %s167 = sphi 0, %s153
      %s171 = sphi 0, %s171
      %s173 = sphi 0, %s171
      %s174 = sphi 0, %s173
      %s188 = sphi 0, %s174
      %s196 = sphi 0, %s198
      %s199 = sphi 0, %s196
      %s200 = sphi 0, %s199
      %s216 = sphi 0, %s200
    $region4: #{tpu_custom_call.1} parent=1 // loop_header_branch
      %21 = sbr.rel (%p19) target = $region8
    $region5: #{tpu_custom_call.1} parent=1 // loop_body
      %s23 = ssub.s32 %s18, 1
      %s24 = ssub.s32 %s18, 2
      %s31 = sadd.s32 1, %s26
      %p32 = scmp.ge.s32.totalorder %s31, 1
      %s33 = scalar_select %p32, 0, %s31
      %s34 = sadd.s32 1, %s25
      %s35 = scalar_select %p32, %s34, %s25
      %p36 = scmp.ge.s32.totalorder %s35, 2
      %s37 = scalar_select %p36, 0, %s35
      %s38 = ssub.s32 %s25, %s37
      %s39 = ssub.s32 %s26, %s33
      %s40 = sor.u32 %s38, %s39
      %p41 = scmp.eq.s32.totalorder %s40, 0
      %s43 = sadd.s32 %s42, 1
      %s44 = scalar_select %p41, %s42, %s43
      %p47 = pneg %p41
      %p48 = scmp.eq.s32.totalorder %s18, 1
      %p49 = por %p47, %p48
      %p50 = scmp.ne.s32.totalorder %s42, %s45
      %p51 = scmp.eq.s32.totalorder %s18, 0
      %p52 = por %p50, %p51
      %p53 = scmp.ne.s32.totalorder %s42, %s45
      %p54 = scmp.eq.s32.totalorder %s23, 1
      %p55 = por %p53, %p54
      %p56 = scmp.ne.s32.totalorder %s45, %s46
      %p57 = scmp.eq.s32.totalorder %s23, 0
      %p58 = por %p56, %p57
      %p59 = scmp.ne.s32.totalorder %s45, %s46
      %p60 = scmp.eq.s32.totalorder %s24, 1
      %p61 = por %p59, %p60
      %p63 = scmp.ne.s32.totalorder %s46, %s62
      %p64 = scmp.eq.s32.totalorder %s24, 0
      %p65 = por %p63, %p64
      %s67 = sadd.s32 %s66, 1
      %p70 = scmp.eq.s32.totalorder %s18, 1
      %p71 = scmp.ne.s32.totalorder %s66, %s68
      %p72 = scmp.eq.s32.totalorder %s18, 0
      %p73 = por %p71, %p72
      %p74 = scmp.ne.s32.totalorder %s66, %s68
      %p75 = scmp.eq.s32.totalorder %s23, 1
      %p76 = por %p74, %p75
      %p77 = scmp.ne.s32.totalorder %s68, %s69
      %p78 = scmp.eq.s32.totalorder %s23, 0
      %p79 = por %p77, %p78
      %p80 = scmp.ne.s32.totalorder %s68, %s69
      %p81 = scmp.eq.s32.totalorder %s24, 1
      %p82 = por %p80, %p81
      %p84 = scmp.ne.s32.totalorder %s69, %s83
      %p85 = scmp.eq.s32.totalorder %s24, 0
      %p86 = por %p84, %p85
      %s88 = sadd.s32 %s87, 1
      %p91 = scmp.eq.s32.totalorder %s18, 1
      %p92 = scmp.ne.s32.totalorder %s87, %s89
      %p93 = scmp.eq.s32.totalorder %s18, 0
      %p94 = por %p92, %p93
      %p95 = scmp.ne.s32.totalorder %s87, %s89
      %p96 = scmp.eq.s32.totalorder %s23, 1
      %p97 = por %p95, %p96
      %p98 = scmp.ne.s32.totalorder %s89, %s90
      %p99 = scmp.eq.s32.totalorder %s23, 0
      %p100 = por %p98, %p99
      %p101 = scmp.ne.s32.totalorder %s89, %s90
      %p102 = scmp.eq.s32.totalorder %s24, 1
      %p103 = por %p101, %p102
      %p105 = scmp.ne.s32.totalorder %s90, %s104
      %p106 = scmp.eq.s32.totalorder %s24, 0
      %p107 = por %p105, %p106
      %s109 = sadd.s32 %s108, 1
      %p112 = scmp.eq.s32.totalorder %s18, 1
      %p113 = scmp.ne.s32.totalorder %s108, %s110
      %p114 = scmp.eq.s32.totalorder %s18, 0
      %p115 = por %p113, %p114
      %p116 = scmp.ne.s32.totalorder %s108, %s110
      %p117 = scmp.eq.s32.totalorder %s23, 1
      %p118 = por %p116, %p117
      %p119 = scmp.ne.s32.totalorder %s110, %s111
      %p120 = scmp.eq.s32.totalorder %s23, 0
      %p121 = por %p119, %p120
      %p122 = scmp.ne.s32.totalorder %s110, %s111
      %p123 = scmp.eq.s32.totalorder %s24, 1
      %p124 = por %p122, %p123
      %p126 = scmp.ne.s32.totalorder %s111, %s125
      %p127 = scmp.eq.s32.totalorder %s24, 0
      %p128 = por %p126, %p127
      %s130 = sadd.s32 %s129, 1
      %p133 = scmp.eq.s32.totalorder %s18, 1
      %p134 = scmp.ne.s32.totalorder %s129, %s131
      %p135 = scmp.eq.s32.totalorder %s18, 0
      %p136 = por %p134, %p135
      %p137 = scmp.ne.s32.totalorder %s129, %s131
      %p138 = scmp.eq.s32.totalorder %s23, 1
      %p139 = por %p137, %p138
      %p140 = scmp.ne.s32.totalorder %s131, %s132
      %p141 = scmp.eq.s32.totalorder %s23, 0
      %p142 = por %p140, %p141
      %p143 = scmp.ne.s32.totalorder %s131, %s132
      %p144 = scmp.eq.s32.totalorder %s24, 1
      %p145 = por %p143, %p144
      %p147 = scmp.ne.s32.totalorder %s132, %s146
      %p148 = scmp.eq.s32.totalorder %s24, 0
      %p149 = por %p147, %p148
      %s151 = sadd.s32 %s150, 1
      %p154 = scmp.eq.s32.totalorder %s18, 1
      %p155 = scmp.ne.s32.totalorder %s150, %s152
      %p156 = scmp.eq.s32.totalorder %s18, 0
      %p157 = por %p155, %p156
      %p158 = scmp.ne.s32.totalorder %s150, %s152
      %p159 = scmp.eq.s32.totalorder %s23, 1
      %p160 = por %p158, %p159
      %p161 = scmp.ne.s32.totalorder %s152, %s153
      %p162 = scmp.eq.s32.totalorder %s23, 0
      %p163 = por %p161, %p162
      %p164 = scmp.ne.s32.totalorder %s152, %s153
      %p165 = scmp.eq.s32.totalorder %s24, 1
      %p166 = por %p164, %p165
      %p168 = scmp.ne.s32.totalorder %s153, %s167
      %p169 = scmp.eq.s32.totalorder %s24, 0
      %p170 = por %p168, %p169
      %s172 = sadd.s32 %s171, 1
      %p175 = scmp.eq.s32.totalorder %s18, 1
      %p176 = scmp.ne.s32.totalorder %s171, %s173
      %p177 = scmp.eq.s32.totalorder %s18, 0
      %p178 = por %p176, %p177
      %p179 = scmp.ne.s32.totalorder %s171, %s173
      %p180 = scmp.eq.s32.totalorder %s23, 1
      %p181 = por %p179, %p180
      %p182 = scmp.ne.s32.totalorder %s173, %s174
      %p183 = scmp.eq.s32.totalorder %s23, 0
      %p184 = por %p182, %p183
      %p185 = scmp.ne.s32.totalorder %s173, %s174
      %p186 = scmp.eq.s32.totalorder %s24, 1
      %p187 = por %p185, %p186
      %p189 = scmp.ne.s32.totalorder %s174, %s188
      %p190 = scmp.eq.s32.totalorder %s24, 0
      %p191 = por %p189, %p190
      %s192 = ssub.s32 %s25, %s37
      %s193 = ssub.s32 %s26, %s33
      %s194 = sor.u32 %s192, %s193
      %p195 = scmp.eq.s32.totalorder %s194, 0
      %s197 = sadd.s32 %s196, 1
      %s198 = scalar_select %p195, %s196, %s197
      %p201 = pneg %p195
      %p202 = scmp.eq.s32.totalorder %s18, 1
      %p203 = por %p201, %p202
      %p204 = scmp.ne.s32.totalorder %s196, %s199
      %p205 = scmp.eq.s32.totalorder %s18, 0
      %p206 = por %p204, %p205
      %p207 = scmp.ne.s32.totalorder %s196, %s199
      %p208 = scmp.eq.s32.totalorder %s23, 1
      %p209 = por %p207, %p208
      %p210 = scmp.ne.s32.totalorder %s199, %s200
      %p211 = scmp.eq.s32.totalorder %s23, 0
      %p212 = por %p210, %p211
      %p213 = scmp.ne.s32.totalorder %s199, %s200
      %p214 = scmp.eq.s32.totalorder %s24, 1
      %p215 = por %p213, %p214
      %p217 = scmp.ne.s32.totalorder %s200, %s216
      %p218 = scmp.eq.s32.totalorder %s24, 0
      %p219 = por %p217, %p218
      %p220 = scmp.le.s32.totalorder 1, %s18
      %p221 = scmp.lt.s32.totalorder %s18, 3
      %p222 = pnand %p220, %p221
      %p223 = pneg %p222
      // Predicated region
      $region9: #{tpu_custom_call.1} parent=5 // pred_check
        _
      $region10: #{tpu_custom_call.1} parent=5 // pred_check_branch
        %225 = sbr.rel (%p222) target = $region12
      $region11: #{tpu_custom_call.1} parent=5 // pred_region
        %s226 = ssub.s32 %s18, 1
        // Predicated region
        $region13: #{tpu_custom_call.1} parent=11 // pred_check
          %p227 = pneg %p79
        $region14: #{tpu_custom_call.1} parent=11 // pred_check_branch
          %229 = sbr.rel (%p227) target = $region16
        $region15: #{tpu_custom_call.1} parent=11 // pred_region
          _
        $region16: #{tpu_custom_call.1} parent=11 // pred_fallthru
          _
        // Predicated region
        $region17: #{tpu_custom_call.1} parent=11 // pred_check
          %p230 = pneg %p100
        $region18: #{tpu_custom_call.1} parent=11 // pred_check_branch
          %232 = sbr.rel (%p230) target = $region20
        $region19: #{tpu_custom_call.1} parent=11 // pred_region
          _
        $region20: #{tpu_custom_call.1} parent=11 // pred_fallthru
          _
        // Predicated region
        $region21: #{tpu_custom_call.1} parent=11 // pred_check
          %p233 = pneg %p121
        $region22: #{tpu_custom_call.1} parent=11 // pred_check_branch
          %235 = sbr.rel (%p233) target = $region24
        $region23: #{tpu_custom_call.1} parent=11 // pred_region
          _
        $region24: #{tpu_custom_call.1} parent=11 // pred_fallthru
          _
        // Predicated region
        $region25: #{tpu_custom_call.1} parent=11 // pred_check
          %p236 = pneg %p142
        $region26: #{tpu_custom_call.1} parent=11 // pred_check_branch
          %238 = sbr.rel (%p236) target = $region28
        $region27: #{tpu_custom_call.1} parent=11 // pred_region
          _
        $region28: #{tpu_custom_call.1} parent=11 // pred_fallthru
          _
        // Predicated region
        $region29: #{tpu_custom_call.1} parent=11 // pred_check
          %p239 = pneg %p163
        $region30: #{tpu_custom_call.1} parent=11 // pred_check_branch
          %241 = sbr.rel (%p239) target = $region32
        $region31: #{tpu_custom_call.1} parent=11 // pred_region
          _
        $region32: #{tpu_custom_call.1} parent=11 // pred_fallthru
          _
        // Predicated region
        $region33: #{tpu_custom_call.1} parent=11 // pred_check
          %p242 = pneg %p184
        $region34: #{tpu_custom_call.1} parent=11 // pred_check_branch
          %244 = sbr.rel (%p242) target = $region36
        $region35: #{tpu_custom_call.1} parent=11 // pred_region
          _
        $region36: #{tpu_custom_call.1} parent=11 // pred_fallthru
          _
      $region12: #{tpu_custom_call.1} parent=5 // pred_fallthru
        _
      %p245 = scmp.lt.s32.totalorder %s18, 2
      // Predicated region
      $region37: #{tpu_custom_call.1} parent=5 // pred_check
        %p246 = pneg %p245
      $region38: #{tpu_custom_call.1} parent=5 // pred_check_branch
        %248 = sbr.rel (%p246) target = $region40
      $region39: #{tpu_custom_call.1} parent=5 // pred_region
        // Predicated region
        $region41: #{tpu_custom_call.1} parent=39 // pred_check
          %p249 = pneg %p52
        $region42: #{tpu_custom_call.1} parent=39 // pred_check_branch
          %251 = sbr.rel (%p249) target = $region44
        $region43: #{tpu_custom_call.1} parent=39 // pred_region
          %s252 = smul.u32 2, %s26
          %p253 = scmp.lt.s32.totalorder %s25, 1
          %s254 = scalar_select %p253, %s25, 1
          %p255 = scmp.lt.s32.totalorder %s252, 1
          %s256 = scalar_select %p255, %s252, 1
          %s257 = smul.addr %s254, 2
          %s258 = sadd.s32 %s256, %s257
          %s259 = smul.addr %s258, 2
          %s260 = scalar_lea.vmem %s0, %s259
          %s261 = smul.u32 2, %s26
        $region44: #{tpu_custom_call.1} parent=39 // pred_fallthru
          _
      $region40: #{tpu_custom_call.1} parent=5 // pred_fallthru
        _
      %p262 = scmp.le.s32.totalorder 1, %s18
      %p263 = scmp.lt.s32.totalorder %s18, 3
      %p264 = pnand %p262, %p263
      %p265 = pneg %p264
      // Predicated region
      $region45: #{tpu_custom_call.1} parent=5 // pred_check
        _
      $region46: #{tpu_custom_call.1} parent=5 // pred_check_branch
        %267 = sbr.rel (%p264) target = $region48
      $region47: #{tpu_custom_call.1} parent=5 // pred_region
        %s268 = ssub.s32 %s18, 1
        %s269 = smul.u32 2, %s28
        %p270 = scmp.lt.s32.totalorder %s27, 1
        %s271 = scalar_select %p270, %s27, 1
        %p272 = scmp.lt.s32.totalorder %s269, 1
        %s273 = scalar_select %p272, %s269, 1
        %s274 = smul.addr %s271, 2
        %s275 = sadd.s32 %s273, %s274
        %s276 = smul.addr %s275, 2
        %s277 = scalar_lea.vmem %s0, %s276
        %p278 = pneg %p58
        %p279 = pneg %p55
        %p280 = pneg %p79
        %p281 = pneg %p76
        %p282 = pneg %p100
        %p283 = pneg %p97
        %p284 = pneg %p121
        %p285 = pneg %p118
        %p286 = pneg %p142
        %p287 = pneg %p139
        %p288 = pneg %p163
        %p289 = pneg %p160
        %p290 = pneg %p184
        %p291 = pneg %p181
        %p292 = pneg %p212
        %p293 = pneg %p209
        %s294 = sand.u32 %s199, 1
        %s295 = scalar_lea.sflag [#allocation4], %s294
        %s296 = sand.u32 %s199, 1
        %s297 = smul.addr %s296, 2
        %s298 = scalar_lea.vmem [#allocation3], %s297
        %s299 = smul.u32 2, %s28
        %p300 = scmp.lt.s32.totalorder %s27, 1
        %s301 = scalar_select %p300, %s27, 1
        %p302 = scmp.lt.s32.totalorder %s299, 1
        %s303 = scalar_select %p302, %s299, 1
        %s304 = smul.addr %s301, 2
        %s305 = sadd.s32 %s303, %s304
        %s306 = smul.addr %s305, 2
        %s307 = scalar_lea.vmem %s0, %s306
        %s308 = smul.u32 2, %s28
        %s309 = smul.u32 2, %s28
        %v311 = vld [vmem:[%s307] sm:$0xf]
        %v312 = vld [vmem:[%s1] sm:$0xf]
        %v313 = vld [vmem:[%s1 + $0x4] sm:$0xf]
        %v314 = vld [vmem:[%s1 + $0x8] sm:$0xf]
        %v315 = vld [vmem:[%s1 + $0xc] sm:$0xf]
        %v316 = vld [vmem:[%s1 + $0x10] sm:$0xf]
        %v317 = vld [vmem:[%s1 + $0x14] sm:$0xf]
        %v318 = vld [vmem:[%s1 + $0x18] sm:$0xf]
        %v319 = vld [vmem:[%s1 + $0x1c] sm:$0xf]
        %v320 = vld [vmem:[%s1 + $0x20] sm:$0xf]
        %v321 = vld [vmem:[%s1 + $0x24] sm:$0xf]
        %v322 = vld [vmem:[%s1 + $0x28] sm:$0xf]
        %v323 = vld [vmem:[%s1 + $0x2c] sm:$0xf]
        %v324 = vld [vmem:[%s1 + $0x30] sm:$0xf]
        %v325 = vld [vmem:[%s1 + $0x34] sm:$0xf]
        %v326 = vld [vmem:[%s1 + $0x38] sm:$0xf]
        %v327 = vld [vmem:[%s1 + $0x3c] sm:$0xf]
        %v328 = vld [vmem:[%s2] sm:$0xff]
        %v329 = vld [vmem:[%s2 + $0x8] sm:$0xff]
        %v330 = vld [vmem:[%s2 + $0x10] sm:$0xff]
        %v331 = vld [vmem:[%s2 + $0x18] sm:$0xff]
        %v332 = vld [vmem:[%s2 + $0x20] sm:$0xff]
        %v333 = vld [vmem:[%s2 + $0x28] sm:$0xff]
        %v334 = vld [vmem:[%s2 + $0x30] sm:$0xff]
        %v335 = vld [vmem:[%s2 + $0x38] sm:$0xff]
        %v336 = vld [vmem:[%s2 + $0x40] sm:$0xff]
        %v337 = vld [vmem:[%s2 + $0x48] sm:$0xff]
        %v338 = vld [vmem:[%s2 + $0x50] sm:$0xff]
        %v339 = vld [vmem:[%s2 + $0x58] sm:$0xff]
        %v340 = vld [vmem:[%s2 + $0x60] sm:$0xff]
        %v341 = vld [vmem:[%s2 + $0x68] sm:$0xff]
        %v342 = vld [vmem:[%s2 + $0x70] sm:$0xff]
        %v343 = vld [vmem:[%s2 + $0x78] sm:$0xff]
        %345 = vset.pattern.permute.xlu0 0
        %346 = vperm.xlu0 %345, %v328
        %v347 = vpop.permute.xlu0 %346
        %350 = vset.pattern.permute.xlu0 0
        %351 = vperm.xlu0 %350, %v329
        %v352 = vpop.permute.xlu0 %351
        %355 = vset.pattern.permute.xlu0 0
        %356 = vperm.xlu0 %355, %v330
        %v357 = vpop.permute.xlu0 %356
        %360 = vset.pattern.permute.xlu0 0
        %361 = vperm.xlu0 %360, %v331
        %v362 = vpop.permute.xlu0 %361
        %365 = vset.pattern.permute.xlu0 0
        %366 = vperm.xlu0 %365, %v332
        %v367 = vpop.permute.xlu0 %366
        %370 = vset.pattern.permute.xlu0 0
        %371 = vperm.xlu0 %370, %v333
        %v372 = vpop.permute.xlu0 %371
        %375 = vset.pattern.permute.xlu0 0
        %376 = vperm.xlu0 %375, %v334
        %v377 = vpop.permute.xlu0 %376
        %380 = vset.pattern.permute.xlu0 0
        %381 = vperm.xlu0 %380, %v335
        %v382 = vpop.permute.xlu0 %381
        %385 = vset.pattern.permute.xlu0 0
        %386 = vperm.xlu0 %385, %v336
        %v387 = vpop.permute.xlu0 %386
        %390 = vset.pattern.permute.xlu0 0
        %391 = vperm.xlu0 %390, %v337
        %v392 = vpop.permute.xlu0 %391
        %395 = vset.pattern.permute.xlu0 0
        %396 = vperm.xlu0 %395, %v338
        %v397 = vpop.permute.xlu0 %396
        %400 = vset.pattern.permute.xlu0 0
        %401 = vperm.xlu0 %400, %v339
        %v402 = vpop.permute.xlu0 %401
        %405 = vset.pattern.permute.xlu0 0
        %406 = vperm.xlu0 %405, %v340
        %v407 = vpop.permute.xlu0 %406
        %410 = vset.pattern.permute.xlu0 0
        %411 = vperm.xlu0 %410, %v341
        %v412 = vpop.permute.xlu0 %411
        %415 = vset.pattern.permute.xlu0 0
        %416 = vperm.xlu0 %415, %v342
        %v417 = vpop.permute.xlu0 %416
        %420 = vset.pattern.permute.xlu0 0
        %421 = vperm.xlu0 %420, %v343
        %v422 = vpop.permute.xlu0 %421
        %v440 = vunpack.c.l.b16 %v312
        %v441 = vunpack.c.l.b16 %v313
        %v442 = vunpack.c.l.b16 %v314
        %v443 = vunpack.c.l.b16 %v315
        %v444 = vunpack.c.l.b16 %v316
        %v445 = vunpack.c.l.b16 %v317
        %v446 = vunpack.c.l.b16 %v318
        %v447 = vunpack.c.l.b16 %v319
        %v448 = vunpack.c.l.b16 %v320
        %v449 = vunpack.c.l.b16 %v321
        %v450 = vunpack.c.l.b16 %v322
        %v451 = vunpack.c.l.b16 %v323
        %v452 = vunpack.c.l.b16 %v324
        %v453 = vunpack.c.l.b16 %v325
        %v454 = vunpack.c.l.b16 %v326
        %v455 = vunpack.c.l.b16 %v327
        %v456 = vpack.c.b16 %v441, %v440
        %v457 = vpack.c.b16 %v443, %v442
        %v458 = vpack.c.b16 %v445, %v444
        %v459 = vpack.c.b16 %v447, %v446
        %v460 = vpack.c.b16 %v449, %v448
        %v461 = vpack.c.b16 %v451, %v450
        %v462 = vpack.c.b16 %v453, %v452
        %v463 = vpack.c.b16 %v455, %v454
        %465 = vst [vmem:[#allocation1] ss:$4 sm:$0xff] %v311
        %v466 = vld.sshfl [vmem:[#allocation1] sm:$0xff pattern:$0x73625140]
        %v467 = vld.sshfl [vmem:[#allocation1 + $0x8] sm:$0xff pattern:$0x73625140]
        %vm468 = vcmask 23552
        %v470 = vsel %vm468, %v456, 0
        %v473 = vsel %vm468, %v457, 0
        %v476 = vsel %vm468, %v458, 0
        %v479 = vsel %vm468, %v459, 0
        %v482 = vsel %vm468, %v460, 0
        %v485 = vsel %vm468, %v461, 0
        %v488 = vsel %vm468, %v462, 0
        %v491 = vsel %vm468, %v463, 0
        %vm493 = vcmask 1040384
        %vm494 = vcmask 1041408
        %v495 = vsel %vm493, 4294967295, 65535
        %v496 = vsel %vm494, %v495, 0
        %v497 = vand.u32 %v466, %v496
        %v499 = vand.u32 %v467, %v496
        %501 = vmatpush.bf16.msra.mxu0 0
        %502 = vmatpush.bf16.msra.mxu0 0
        %503 = vmatpush.bf16.msra.mxu0 0
        %504 = vmatpush.bf16.msra.mxu0 0
        %505 = vmatpush.bf16.msra.mxu0 0
        %506 = vmatpush.bf16.msra.mxu0 0
        %507 = vmatpush.bf16.msra.mxu0 0
        %508 = vmatpush.bf16.msra.mxu0 %v497
        %509 = vmatmul.bf16.gmra.mxu0 %v470
        %v510 = vpop.f32.mrf.mxu0
        %v511 = vadd.f32 %v347, %v510
        %v512 = vpop.f32.mrf.mxu0
        %v513 = vadd.f32 %v352, %v512
        %514 = vmatmul.bf16.gmra.mxu0 %v473
        %v515 = vpop.f32.mrf.mxu0
        %v516 = vadd.f32 %v357, %v515
        %v517 = vpop.f32.mrf.mxu0
        %v518 = vadd.f32 %v362, %v517
        %519 = vmatmul.bf16.gmra.mxu0 %v476
        %v520 = vpop.f32.mrf.mxu0
        %v521 = vadd.f32 %v367, %v520
        %v522 = vpop.f32.mrf.mxu0
        %v523 = vadd.f32 %v372, %v522
        %524 = vmatmul.bf16.gmra.mxu0 %v479
        %v525 = vpop.f32.mrf.mxu0
        %v526 = vadd.f32 %v377, %v525
        %v527 = vpop.f32.mrf.mxu0
        %v528 = vadd.f32 %v382, %v527
        %529 = vmatmul.bf16.gmra.mxu0 %v482
        %v530 = vpop.f32.mrf.mxu0
        %v531 = vadd.f32 %v387, %v530
        %v532 = vpop.f32.mrf.mxu0
        %v533 = vadd.f32 %v392, %v532
        %534 = vmatmul.bf16.gmra.mxu0 %v485
        %v535 = vpop.f32.mrf.mxu0
        %v536 = vadd.f32 %v397, %v535
        %v537 = vpop.f32.mrf.mxu0
        %v538 = vadd.f32 %v402, %v537
        %539 = vmatmul.bf16.gmra.mxu0 %v488
        %v540 = vpop.f32.mrf.mxu0
        %v541 = vadd.f32 %v407, %v540
        %v542 = vpop.f32.mrf.mxu0
        %v543 = vadd.f32 %v412, %v542
        %544 = vmatmul.bf16.gmra.mxu0 %v491
        %v545 = vpop.f32.mrf.mxu0
        %v546 = vadd.f32 %v417, %v545
        %v547 = vpop.f32.mrf.mxu0
        %v548 = vadd.f32 %v422, %v547
        %549 = vdwg.mxu0
        %550 = vmatpush.bf16.msra.mxu0 0
        %551 = vmatpush.bf16.msra.mxu0 0
        %552 = vmatpush.bf16.msra.mxu0 0
        %553 = vmatpush.bf16.msra.mxu0 0
        %554 = vmatpush.bf16.msra.mxu0 0
        %555 = vmatpush.bf16.msra.mxu0 0
        %556 = vmatpush.bf16.msra.mxu0 0
        %557 = vmatpush.bf16.msra.mxu0 %v499
        %558 = vmatmul.bf16.gmra.mxu0 %v470
        %v559 = vpop.f32.mrf.mxu0
        %v560 = vadd.f32 %v347, %v559
        %v561 = vpop.f32.mrf.mxu0
        %v562 = vadd.f32 %v352, %v561
        %563 = vmatmul.bf16.gmra.mxu0 %v473
        %v564 = vpop.f32.mrf.mxu0
        %v565 = vadd.f32 %v357, %v564
        %v566 = vpop.f32.mrf.mxu0
        %v567 = vadd.f32 %v362, %v566
        %568 = vmatmul.bf16.gmra.mxu0 %v476
        %v569 = vpop.f32.mrf.mxu0
        %v570 = vadd.f32 %v367, %v569
        %v571 = vpop.f32.mrf.mxu0
        %v572 = vadd.f32 %v372, %v571
        %573 = vmatmul.bf16.gmra.mxu0 %v479
        %v574 = vpop.f32.mrf.mxu0
        %v575 = vadd.f32 %v377, %v574
        %v576 = vpop.f32.mrf.mxu0
        %v577 = vadd.f32 %v382, %v576
        %578 = vmatmul.bf16.gmra.mxu0 %v482
        %v579 = vpop.f32.mrf.mxu0
        %v580 = vadd.f32 %v387, %v579
        %v581 = vpop.f32.mrf.mxu0
        %v582 = vadd.f32 %v392, %v581
        %583 = vmatmul.bf16.gmra.mxu0 %v485
        %v584 = vpop.f32.mrf.mxu0
        %v585 = vadd.f32 %v397, %v584
        %v586 = vpop.f32.mrf.mxu0
        %v587 = vadd.f32 %v402, %v586
        %588 = vmatmul.bf16.gmra.mxu0 %v488
        %v589 = vpop.f32.mrf.mxu0
        %v590 = vadd.f32 %v407, %v589
        %v591 = vpop.f32.mrf.mxu0
        %v592 = vadd.f32 %v412, %v591
        %593 = vmatmul.bf16.gmra.mxu0 %v491
        %v594 = vpop.f32.mrf.mxu0
        %v595 = vadd.f32 %v417, %v594
        %v596 = vpop.f32.mrf.mxu0
        %v597 = vadd.f32 %v422, %v596
        %598 = vdwg.mxu0
        %v599 = vmax.f32 %v511, 0.0
        %v600 = vmax.f32 %v560, 0.0
        %v601 = vmax.f32 %v513, 0.0
        %v602 = vmax.f32 %v562, 0.0
        %v603 = vmax.f32 %v516, 0.0
        %v604 = vmax.f32 %v565, 0.0
        %v605 = vmax.f32 %v518, 0.0
        %v606 = vmax.f32 %v567, 0.0
        %v607 = vmax.f32 %v521, 0.0
        %v608 = vmax.f32 %v570, 0.0
        %v609 = vmax.f32 %v523, 0.0
        %v610 = vmax.f32 %v572, 0.0
        %v611 = vmax.f32 %v526, 0.0
        %v612 = vmax.f32 %v575, 0.0
        %v613 = vmax.f32 %v528, 0.0
        %v614 = vmax.f32 %v577, 0.0
        %v615 = vmax.f32 %v531, 0.0
        %v616 = vmax.f32 %v580, 0.0
        %v617 = vmax.f32 %v533, 0.0
        %v618 = vmax.f32 %v582, 0.0
        %v619 = vmax.f32 %v536, 0.0
        %v620 = vmax.f32 %v585, 0.0
        %v621 = vmax.f32 %v538, 0.0
        %v622 = vmax.f32 %v587, 0.0
        %v623 = vmax.f32 %v541, 0.0
        %v624 = vmax.f32 %v590, 0.0
        %v625 = vmax.f32 %v543, 0.0
        %v626 = vmax.f32 %v592, 0.0
        %v627 = vmax.f32 %v546, 0.0
        %v628 = vmax.f32 %v595, 0.0
        %v629 = vmax.f32 %v548, 0.0
        %v630 = vmax.f32 %v597, 0.0
        %v631 = vpack.c.bf16 %v601, %v599
        %v632 = vpack.c.bf16 %v602, %v600
        %v633 = vpack.c.bf16 %v605, %v603
        %v634 = vpack.c.bf16 %v606, %v604
        %v635 = vpack.c.bf16 %v609, %v607
        %v636 = vpack.c.bf16 %v610, %v608
        %v637 = vpack.c.bf16 %v613, %v611
        %v638 = vpack.c.bf16 %v614, %v612
        %v639 = vpack.c.bf16 %v617, %v615
        %v640 = vpack.c.bf16 %v618, %v616
        %v641 = vpack.c.bf16 %v621, %v619
        %v642 = vpack.c.bf16 %v622, %v620
        %v643 = vpack.c.bf16 %v625, %v623
        %v644 = vpack.c.bf16 %v626, %v624
        %v645 = vpack.c.bf16 %v629, %v627
        %v646 = vpack.c.bf16 %v630, %v628
        %v647 = vld [vmem:[%s3] sm:$0xf]
        %v648 = vld [vmem:[%s3 + $0x4] sm:$0xf]
        %v649 = vld [vmem:[%s3 + $0x8] sm:$0xf]
        %v650 = vld [vmem:[%s3 + $0xc] sm:$0xf]
        %v651 = vld [vmem:[%s3 + $0x10] sm:$0xf]
        %v652 = vld [vmem:[%s3 + $0x14] sm:$0xf]
        %v653 = vld [vmem:[%s3 + $0x18] sm:$0xf]
        %v654 = vld [vmem:[%s3 + $0x1c] sm:$0xf]
        %v655 = vld [vmem:[%s3 + $0x20] sm:$0xf]
        %v656 = vld [vmem:[%s3 + $0x24] sm:$0xf]
        %v657 = vld [vmem:[%s3 + $0x28] sm:$0xf]
        %v658 = vld [vmem:[%s3 + $0x2c] sm:$0xf]
        %v659 = vld [vmem:[%s3 + $0x30] sm:$0xf]
        %v660 = vld [vmem:[%s3 + $0x34] sm:$0xf]
        %v661 = vld [vmem:[%s3 + $0x38] sm:$0xf]
        %v662 = vld [vmem:[%s3 + $0x3c] sm:$0xf]
        %v663 = vld [vmem:[%s4] sm:$0xff]
        %v664 = vld [vmem:[%s4 + $0x8] sm:$0xff]
        %v665 = vld [vmem:[%s4 + $0x10] sm:$0xff]
        %v666 = vld [vmem:[%s4 + $0x18] sm:$0xff]
        %v667 = vld [vmem:[%s4 + $0x20] sm:$0xff]
        %v668 = vld [vmem:[%s4 + $0x28] sm:$0xff]
        %v669 = vld [vmem:[%s4 + $0x30] sm:$0xff]
        %v670 = vld [vmem:[%s4 + $0x38] sm:$0xff]
        %v671 = vld [vmem:[%s4 + $0x40] sm:$0xff]
        %v672 = vld [vmem:[%s4 + $0x48] sm:$0xff]
        %v673 = vld [vmem:[%s4 + $0x50] sm:$0xff]
        %v674 = vld [vmem:[%s4 + $0x58] sm:$0xff]
        %v675 = vld [vmem:[%s4 + $0x60] sm:$0xff]
        %v676 = vld [vmem:[%s4 + $0x68] sm:$0xff]
        %v677 = vld [vmem:[%s4 + $0x70] sm:$0xff]
        %v678 = vld [vmem:[%s4 + $0x78] sm:$0xff]
        %680 = vset.pattern.permute.xlu0 0
        %681 = vperm.xlu0 %680, %v663
        %v682 = vpop.permute.xlu0 %681
        %685 = vset.pattern.permute.xlu0 0
        %686 = vperm.xlu0 %685, %v664
        %v687 = vpop.permute.xlu0 %686
        %690 = vset.pattern.permute.xlu0 0
        %691 = vperm.xlu0 %690, %v665
        %v692 = vpop.permute.xlu0 %691
        %695 = vset.pattern.permute.xlu0 0
        %696 = vperm.xlu0 %695, %v666
        %v697 = vpop.permute.xlu0 %696
        %700 = vset.pattern.permute.xlu0 0
        %701 = vperm.xlu0 %700, %v667
        %v702 = vpop.permute.xlu0 %701
        %705 = vset.pattern.permute.xlu0 0
        %706 = vperm.xlu0 %705, %v668
        %v707 = vpop.permute.xlu0 %706
        %710 = vset.pattern.permute.xlu0 0
        %711 = vperm.xlu0 %710, %v669
        %v712 = vpop.permute.xlu0 %711
        %715 = vset.pattern.permute.xlu0 0
        %716 = vperm.xlu0 %715, %v670
        %v717 = vpop.permute.xlu0 %716
        %720 = vset.pattern.permute.xlu0 0
        %721 = vperm.xlu0 %720, %v671
        %v722 = vpop.permute.xlu0 %721
        %725 = vset.pattern.permute.xlu0 0
        %726 = vperm.xlu0 %725, %v672
        %v727 = vpop.permute.xlu0 %726
        %730 = vset.pattern.permute.xlu0 0
        %731 = vperm.xlu0 %730, %v673
        %v732 = vpop.permute.xlu0 %731
        %735 = vset.pattern.permute.xlu0 0
        %736 = vperm.xlu0 %735, %v674
        %v737 = vpop.permute.xlu0 %736
        %740 = vset.pattern.permute.xlu0 0
        %741 = vperm.xlu0 %740, %v675
        %v742 = vpop.permute.xlu0 %741
        %745 = vset.pattern.permute.xlu0 0
        %746 = vperm.xlu0 %745, %v676
        %v747 = vpop.permute.xlu0 %746
        %750 = vset.pattern.permute.xlu0 0
        %751 = vperm.xlu0 %750, %v677
        %v752 = vpop.permute.xlu0 %751
        %755 = vset.pattern.permute.xlu0 0
        %756 = vperm.xlu0 %755, %v678
        %v757 = vpop.permute.xlu0 %756
        %v775 = vunpack.c.l.b16 %v647
        %v776 = vunpack.c.l.b16 %v648
        %v777 = vunpack.c.l.b16 %v649
        %v778 = vunpack.c.l.b16 %v650
        %v779 = vunpack.c.l.b16 %v651
        %v780 = vunpack.c.l.b16 %v652
        %v781 = vunpack.c.l.b16 %v653
        %v782 = vunpack.c.l.b16 %v654
        %v783 = vunpack.c.l.b16 %v655
        %v784 = vunpack.c.l.b16 %v656
        %v785 = vunpack.c.l.b16 %v657
        %v786 = vunpack.c.l.b16 %v658
        %v787 = vunpack.c.l.b16 %v659
        %v788 = vunpack.c.l.b16 %v660
        %v789 = vunpack.c.l.b16 %v661
        %v790 = vunpack.c.l.b16 %v662
        %v791 = vpack.c.b16 %v776, %v775
        %v792 = vpack.c.b16 %v778, %v777
        %v793 = vpack.c.b16 %v780, %v779
        %v794 = vpack.c.b16 %v782, %v781
        %v795 = vpack.c.b16 %v784, %v783
        %v796 = vpack.c.b16 %v786, %v785
        %v797 = vpack.c.b16 %v788, %v787
        %v798 = vpack.c.b16 %v790, %v789
        %807 = vmatpush.bf16.msra.mxu0 %v645
        %808 = vmatpush.bf16.msra.mxu0 %v643
        %809 = vmatpush.bf16.msra.mxu0 %v641
        %810 = vmatpush.bf16.msra.mxu0 %v639
        %811 = vmatpush.bf16.msra.mxu0 %v637
        %812 = vmatpush.bf16.msra.mxu0 %v635
        %813 = vmatpush.bf16.msra.mxu0 %v633
        %814 = vmatpush.bf16.msra.mxu0 %v631
        %815 = vmatmul.bf16.gmra.mxu0 %v791
        %v816 = vpop.f32.mrf.mxu0
        %v817 = vadd.f32 %v682, %v816
        %v818 = vpop.f32.mrf.mxu0
        %v819 = vadd.f32 %v687, %v818
        %820 = vmatmul.bf16.gmra.mxu0 %v792
        %v821 = vpop.f32.mrf.mxu0
        %v822 = vadd.f32 %v692, %v821
        %v823 = vpop.f32.mrf.mxu0
        %v824 = vadd.f32 %v697, %v823
        %825 = vmatmul.bf16.gmra.mxu0 %v793
        %v826 = vpop.f32.mrf.mxu0
        %v827 = vadd.f32 %v702, %v826
        %v828 = vpop.f32.mrf.mxu0
        %v829 = vadd.f32 %v707, %v828
        %830 = vmatmul.bf16.gmra.mxu0 %v794
        %v831 = vpop.f32.mrf.mxu0
        %v832 = vadd.f32 %v712, %v831
        %v833 = vpop.f32.mrf.mxu0
        %v834 = vadd.f32 %v717, %v833
        %835 = vmatmul.bf16.gmra.mxu0 %v795
        %v836 = vpop.f32.mrf.mxu0
        %v837 = vadd.f32 %v722, %v836
        %v838 = vpop.f32.mrf.mxu0
        %v839 = vadd.f32 %v727, %v838
        %840 = vmatmul.bf16.gmra.mxu0 %v796
        %v841 = vpop.f32.mrf.mxu0
        %v842 = vadd.f32 %v732, %v841
        %v843 = vpop.f32.mrf.mxu0
        %v844 = vadd.f32 %v737, %v843
        %845 = vmatmul.bf16.gmra.mxu0 %v797
        %v846 = vpop.f32.mrf.mxu0
        %v847 = vadd.f32 %v742, %v846
        %v848 = vpop.f32.mrf.mxu0
        %v849 = vadd.f32 %v747, %v848
        %850 = vmatmul.bf16.gmra.mxu0 %v798
        %v851 = vpop.f32.mrf.mxu0
        %v852 = vadd.f32 %v752, %v851
        %v853 = vpop.f32.mrf.mxu0
        %v854 = vadd.f32 %v757, %v853
        %855 = vdwg.mxu0
        %856 = vmatpush.bf16.msra.mxu0 %v646
        %857 = vmatpush.bf16.msra.mxu0 %v644
        %858 = vmatpush.bf16.msra.mxu0 %v642
        %859 = vmatpush.bf16.msra.mxu0 %v640
        %860 = vmatpush.bf16.msra.mxu0 %v638
        %861 = vmatpush.bf16.msra.mxu0 %v636
        %862 = vmatpush.bf16.msra.mxu0 %v634
        %863 = vmatpush.bf16.msra.mxu0 %v632
        %864 = vmatmul.bf16.gmra.mxu0 %v791
        %v865 = vpop.f32.mrf.mxu0
        %v866 = vadd.f32 %v682, %v865
        %v867 = vpop.f32.mrf.mxu0
        %v868 = vadd.f32 %v687, %v867
        %869 = vmatmul.bf16.gmra.mxu0 %v792
        %v870 = vpop.f32.mrf.mxu0
        %v871 = vadd.f32 %v692, %v870
        %v872 = vpop.f32.mrf.mxu0
        %v873 = vadd.f32 %v697, %v872
        %874 = vmatmul.bf16.gmra.mxu0 %v793
        %v875 = vpop.f32.mrf.mxu0
        %v876 = vadd.f32 %v702, %v875
        %v877 = vpop.f32.mrf.mxu0
        %v878 = vadd.f32 %v707, %v877
        %879 = vmatmul.bf16.gmra.mxu0 %v794
        %v880 = vpop.f32.mrf.mxu0
        %v881 = vadd.f32 %v712, %v880
        %v882 = vpop.f32.mrf.mxu0
        %v883 = vadd.f32 %v717, %v882
        %884 = vmatmul.bf16.gmra.mxu0 %v795
        %v885 = vpop.f32.mrf.mxu0
        %v886 = vadd.f32 %v722, %v885
        %v887 = vpop.f32.mrf.mxu0
        %v888 = vadd.f32 %v727, %v887
        %889 = vmatmul.bf16.gmra.mxu0 %v796
        %v890 = vpop.f32.mrf.mxu0
        %v891 = vadd.f32 %v732, %v890
        %v892 = vpop.f32.mrf.mxu0
        %v893 = vadd.f32 %v737, %v892
        %894 = vmatmul.bf16.gmra.mxu0 %v797
        %v895 = vpop.f32.mrf.mxu0
        %v896 = vadd.f32 %v742, %v895
        %v897 = vpop.f32.mrf.mxu0
        %v898 = vadd.f32 %v747, %v897
        %899 = vmatmul.bf16.gmra.mxu0 %v798
        %v900 = vpop.f32.mrf.mxu0
        %v901 = vadd.f32 %v752, %v900
        %v902 = vpop.f32.mrf.mxu0
        %v903 = vadd.f32 %v757, %v902
        %904 = vdwg.mxu0
        %v905 = vmax.f32 %v817, 0.0
        %v906 = vmax.f32 %v866, 0.0
        %v907 = vmax.f32 %v819, 0.0
        %v908 = vmax.f32 %v868, 0.0
        %v909 = vmax.f32 %v822, 0.0
        %v910 = vmax.f32 %v871, 0.0
        %v911 = vmax.f32 %v824, 0.0
        %v912 = vmax.f32 %v873, 0.0
        %v913 = vmax.f32 %v827, 0.0
        %v914 = vmax.f32 %v876, 0.0
        %v915 = vmax.f32 %v829, 0.0
        %v916 = vmax.f32 %v878, 0.0
        %v917 = vmax.f32 %v832, 0.0
        %v918 = vmax.f32 %v881, 0.0
        %v919 = vmax.f32 %v834, 0.0
        %v920 = vmax.f32 %v883, 0.0
        %v921 = vmax.f32 %v837, 0.0
        %v922 = vmax.f32 %v886, 0.0
        %v923 = vmax.f32 %v839, 0.0
        %v924 = vmax.f32 %v888, 0.0
        %v925 = vmax.f32 %v842, 0.0
        %v926 = vmax.f32 %v891, 0.0
        %v927 = vmax.f32 %v844, 0.0
        %v928 = vmax.f32 %v893, 0.0
        %v929 = vmax.f32 %v847, 0.0
        %v930 = vmax.f32 %v896, 0.0
        %v931 = vmax.f32 %v849, 0.0
        %v932 = vmax.f32 %v898, 0.0
        %v933 = vmax.f32 %v852, 0.0
        %v934 = vmax.f32 %v901, 0.0
        %v935 = vmax.f32 %v854, 0.0
        %v936 = vmax.f32 %v903, 0.0
        %v937 = vld [vmem:[%s5] sm:$0xff]
        %v938 = vld [vmem:[%s5 + $0x8] sm:$0xff]
        %v939 = vld [vmem:[%s5 + $0x10] sm:$0xff]
        %v940 = vld [vmem:[%s5 + $0x18] sm:$0xff]
        %v941 = vld [vmem:[%s5 + $0x20] sm:$0xff]
        %v942 = vld [vmem:[%s5 + $0x28] sm:$0xff]
        %v943 = vld [vmem:[%s5 + $0x30] sm:$0xff]
        %v944 = vld [vmem:[%s5 + $0x38] sm:$0xff]
        %v945 = vld [vmem:[%s5 + $0x40] sm:$0xff]
        %v946 = vld [vmem:[%s5 + $0x48] sm:$0xff]
        %v947 = vld [vmem:[%s5 + $0x50] sm:$0xff]
        %v948 = vld [vmem:[%s5 + $0x58] sm:$0xff]
        %v949 = vld [vmem:[%s5 + $0x60] sm:$0xff]
        %v950 = vld [vmem:[%s5 + $0x68] sm:$0xff]
        %v951 = vld [vmem:[%s5 + $0x70] sm:$0xff]
        %v952 = vld [vmem:[%s5 + $0x78] sm:$0xff]
        %954 = vset.pattern.permute.xlu0 0
        %955 = vperm.xlu0 %954, %v937
        %v956 = vpop.permute.xlu0 %955
        %959 = vset.pattern.permute.xlu0 0
        %960 = vperm.xlu0 %959, %v938
        %v961 = vpop.permute.xlu0 %960
        %964 = vset.pattern.permute.xlu0 0
        %965 = vperm.xlu0 %964, %v939
        %v966 = vpop.permute.xlu0 %965
        %969 = vset.pattern.permute.xlu0 0
        %970 = vperm.xlu0 %969, %v940
        %v971 = vpop.permute.xlu0 %970
        %974 = vset.pattern.permute.xlu0 0
        %975 = vperm.xlu0 %974, %v941
        %v976 = vpop.permute.xlu0 %975
        %979 = vset.pattern.permute.xlu0 0
        %980 = vperm.xlu0 %979, %v942
        %v981 = vpop.permute.xlu0 %980
        %984 = vset.pattern.permute.xlu0 0
        %985 = vperm.xlu0 %984, %v943
        %v986 = vpop.permute.xlu0 %985
        %989 = vset.pattern.permute.xlu0 0
        %990 = vperm.xlu0 %989, %v944
        %v991 = vpop.permute.xlu0 %990
        %994 = vset.pattern.permute.xlu0 0
        %995 = vperm.xlu0 %994, %v945
        %v996 = vpop.permute.xlu0 %995
        %999 = vset.pattern.permute.xlu0 0
        %1000 = vperm.xlu0 %999, %v946
        %v1001 = vpop.permute.xlu0 %1000
        %1004 = vset.pattern.permute.xlu0 0
        %1005 = vperm.xlu0 %1004, %v947
        %v1006 = vpop.permute.xlu0 %1005
        %1009 = vset.pattern.permute.xlu0 0
        %1010 = vperm.xlu0 %1009, %v948
        %v1011 = vpop.permute.xlu0 %1010
        %1014 = vset.pattern.permute.xlu0 0
        %1015 = vperm.xlu0 %1014, %v949
        %v1016 = vpop.permute.xlu0 %1015
        %1019 = vset.pattern.permute.xlu0 0
        %1020 = vperm.xlu0 %1019, %v950
        %v1021 = vpop.permute.xlu0 %1020
        %1024 = vset.pattern.permute.xlu0 0
        %1025 = vperm.xlu0 %1024, %v951
        %v1026 = vpop.permute.xlu0 %1025
        %1029 = vset.pattern.permute.xlu0 0
        %1030 = vperm.xlu0 %1029, %v952
        %v1031 = vpop.permute.xlu0 %1030
        %v1033 = vmul.f32 %v956, %v905
        %v1034 = vmul.f32 %v956, %v906
        %v1035 = vmul.f32 %v961, %v907
        %v1036 = vmul.f32 %v961, %v908
        %v1037 = vmul.f32 %v966, %v909
        %v1038 = vmul.f32 %v966, %v910
        %v1039 = vmul.f32 %v971, %v911
        %v1040 = vmul.f32 %v971, %v912
        %v1041 = vmul.f32 %v976, %v913
        %v1042 = vmul.f32 %v976, %v914
        %v1043 = vmul.f32 %v981, %v915
        %v1044 = vmul.f32 %v981, %v916
        %v1045 = vmul.f32 %v986, %v917
        %v1046 = vmul.f32 %v986, %v918
        %v1047 = vmul.f32 %v991, %v919
        %v1048 = vmul.f32 %v991, %v920
        %v1049 = vmul.f32 %v996, %v921
        %v1050 = vmul.f32 %v996, %v922
        %v1051 = vmul.f32 %v1001, %v923
        %v1052 = vmul.f32 %v1001, %v924
        %v1053 = vmul.f32 %v1006, %v925
        %v1054 = vmul.f32 %v1006, %v926
        %v1055 = vmul.f32 %v1011, %v927
        %v1056 = vmul.f32 %v1011, %v928
        %v1057 = vmul.f32 %v1016, %v929
        %v1058 = vmul.f32 %v1016, %v930
        %v1059 = vmul.f32 %v1021, %v931
        %v1060 = vmul.f32 %v1021, %v932
        %v1061 = vmul.f32 %v1026, %v933
        %v1062 = vmul.f32 %v1026, %v934
        %v1063 = vmul.f32 %v1031, %v935
        %v1064 = vmul.f32 %v1031, %v936
        %v1065 = vadd.f32 %v1033, %v1035
        %v1066 = vadd.f32 %v1065, %v1037
        %v1067 = vadd.f32 %v1066, %v1039
        %v1068 = vadd.f32 %v1067, %v1041
        %v1069 = vadd.f32 %v1068, %v1043
        %v1070 = vadd.f32 %v1069, %v1045
        %v1071 = vadd.f32 %v1070, %v1047
        %v1072 = vadd.f32 %v1071, %v1049
        %v1073 = vadd.f32 %v1072, %v1051
        %v1074 = vadd.f32 %v1073, %v1053
        %v1075 = vadd.f32 %v1074, %v1055
        %v1076 = vadd.f32 %v1075, %v1057
        %v1077 = vadd.f32 %v1076, %v1059
        %v1078 = vadd.f32 %v1077, %v1061
        %v1079 = vadd.f32 %v1078, %v1063
        %v1080 = vrot.slane %v1079, 4
        %v1081 = vadd.f32 %v1079, %v1080
        %v1082 = vrot.slane %v1081, 2
        %v1083 = vadd.f32 %v1081, %v1082
        %v1084 = vrot.slane %v1083, 1
        %v1085 = vadd.f32 %v1083, %v1084
        %v1086 = vadd.f32 %v1034, %v1036
        %v1087 = vadd.f32 %v1086, %v1038
        %v1088 = vadd.f32 %v1087, %v1040
        %v1089 = vadd.f32 %v1088, %v1042
        %v1090 = vadd.f32 %v1089, %v1044
        %v1091 = vadd.f32 %v1090, %v1046
        %v1092 = vadd.f32 %v1091, %v1048
        %v1093 = vadd.f32 %v1092, %v1050
        %v1094 = vadd.f32 %v1093, %v1052
        %v1095 = vadd.f32 %v1094, %v1054
        %v1096 = vadd.f32 %v1095, %v1056
        %v1097 = vadd.f32 %v1096, %v1058
        %v1098 = vadd.f32 %v1097, %v1060
        %v1099 = vadd.f32 %v1098, %v1062
        %v1100 = vadd.f32 %v1099, %v1064
        %v1101 = vrot.slane %v1100, 4
        %v1102 = vadd.f32 %v1100, %v1101
        %v1103 = vrot.slane %v1102, 2
        %v1104 = vadd.f32 %v1102, %v1103
        %v1105 = vrot.slane %v1104, 1
        %v1106 = vadd.f32 %v1104, %v1105
        %v1107 = vld [vmem:[#allocation2] sm:$0x1]
        %1109 = vset.pattern.permute.xlu0 0
        %1110 = vperm.xlu0 %1109, %v1107
        %v1111 = vpop.permute.xlu0 %1110
        %v1113 = vperm.slane %v1111, 0
        %v1114 = vadd.f32 %v1085, %v1113
        %v1115 = vadd.f32 %v1106, %v1113
        %v1116 = vmax.f32 %v1114, 0.0
        %v1117 = vmax.f32 %v1115, 0.0
        %v1120 = vrot.slane %v1117, 7
        %v1121 = vsel %vm493, %v1116, %v1120
        %v1123 = vlaneseq
        %vm1124 = vcmp.ge.s32.totalorder %v1123, 0
        %vm1125 = vcmp.lt.s32.totalorder %v1123, 256
        %vm1126 = vmand %vm1124, %vm1125
        %1127 = vst.msk [vmem:[%s298] sm:$0x3] %vm1126, %v1121
        %s1128 = sand.u32 %s199, 1
        %s1129 = scalar_lea.sflag [#allocation4], %s1128
        %s1130 = sand.u32 %s199, 1
        %s1131 = smul.addr %s1130, 2
        %s1132 = scalar_lea.vmem [#allocation3], %s1131
        // Predicated region
        $region49: #{tpu_custom_call.1} parent=47 // pred_check
          %p1133 = pneg %p209
        $region50: #{tpu_custom_call.1} parent=47 // pred_check_branch
          %1135 = sbr.rel (%p1133) target = $region52
        $region51: #{tpu_custom_call.1} parent=47 // pred_region
          %s1136 = smul.u32 2, %s28
          %1138 = vsyncadd %s1129, 0
          %s1139 = smul.addr %s27, 2
          %s1140 = sadd.s32 %s1136, %s1139
          %s1141 = scalar_lea.hbm %s7, %s1140
          %s1143 = sshll.u32 %s1132, 4
          %s1144 = int_to_ptr.vmem [resolvable:$true] %s1143
          %s1145 = sshll.u32 %s1141, 4
          %s1146 = int_to_ptr.hbm [resolvable:$true] %s1145
          %1148 = dma.vmem_to_hbm [thread:$0]  %s1144, 32, %s1146, %s1129
        $region52: #{tpu_custom_call.1} parent=47 // pred_fallthru
          _
      $region48: #{tpu_custom_call.1} parent=5 // pred_fallthru
        _
      %p1149 = scmp.le.s32.totalorder 2, %s18
      // Predicated region
      $region53: #{tpu_custom_call.1} parent=5 // pred_check
        %p1150 = pneg %p1149
      $region54: #{tpu_custom_call.1} parent=5 // pred_check_branch
        %1152 = sbr.rel (%p1150) target = $region56
      $region55: #{tpu_custom_call.1} parent=5 // pred_region
        %s1153 = ssub.s32 %s18, 2
        // Predicated region
        $region57: #{tpu_custom_call.1} parent=55 // pred_check
          %p1154 = pneg %p215
        $region58: #{tpu_custom_call.1} parent=55 // pred_check_branch
          %1156 = sbr.rel (%p1154) target = $region60
        $region59: #{tpu_custom_call.1} parent=55 // pred_region
          %s1157 = sand.u32 %s200, 1
          %s1158 = scalar_lea.sflag [#allocation4], %s1157
          %s1159 = sand.u32 %s200, 1
          %s1160 = smul.addr %s1159, 2
          %s1161 = scalar_lea.vmem [#allocation3], %s1160
          %1163 = dma.done %s1158, 32
        $region60: #{tpu_custom_call.1} parent=55 // pred_fallthru
          _
      $region56: #{tpu_custom_call.1} parent=5 // pred_fallthru
        _
    $region6: #{tpu_custom_call.1} parent=1 // loop_footer
      %s22 = sadd.s32 1, %s18
    $region7: #{tpu_custom_call.1} parent=1 // loop_footer_branch
      %17 = sbr.rel target = $region3
    $region8: #{tpu_custom_call.1} parent=1 // loop_exit
      _
    %1164 = vsyncpa [#allocation4], 1
    %s1165 = scalar_lea.sflag [#allocation4], 1
    %1166 = vsyncpa %s1165, 1

</llo_original>
